<compile_context>
chip_gen: v5e
topology: v5e:2x2
jax: 0.10.0
libtpu: 0.0.40
codegen_flags: <defaults>
</compile_context>

<pallas_src>
import jax
import jax.numpy as jnp
from jax import lax
from jax.experimental import pallas as pl
from jax.experimental.pallas import tpu as pltpu


def _silu_linear_split_kernel(x_ref, w_ref, b_ref, scale_ref, shift_ref):
    # SiLU in f32 (VPU + EUP sigmoid), then back to the input dtype for the MXU.
    x = x_ref[...].astype(jnp.float32)
    silu = (x * jax.nn.sigmoid(x)).astype(x_ref.dtype)          # (B, F)

    # Weight tile is (2, tc, F): [0] = scale rows, [1] = shift rows,
    # still in (out, in) layout -> contract feature dims directly (no transpose).
    dn = (((1,), (1,)), ((), ()))
    acc_scale = lax.dot_general(silu, w_ref[0], dimension_numbers=dn,
                                preferred_element_type=jnp.float32)  # (B, tc)
    acc_shift = lax.dot_general(silu, w_ref[1], dimension_numbers=dn,
                                preferred_element_type=jnp.float32)  # (B, tc)

    b_scale = b_ref[0:1, :].astype(jnp.float32)                 # (1, tc)
    b_shift = b_ref[1:2, :].astype(jnp.float32)                 # (1, tc)

    scale_ref[...] = (acc_scale + b_scale).astype(scale_ref.dtype)
    shift_ref[...] = (acc_shift + b_shift).astype(shift_ref.dtype)


def _choose_col_tile(C, F, itemsize):
    """Tile width over the per-output channel dim C."""
    # Small / non-128-aligned channel counts: whole-array block (exempt from
    # the (8,128) rule); these configs are launch-overhead dominated anyway.
    if C < 128 or C % 128 != 0:
        return C
    # Cap the (2, tc, F) weight block at ~4 MiB so the double-buffered pair
    # stays comfortably inside v5e's 16 MiB scoped VMEM (ample headroom on
    # v6e 32 MiB / v7x 32 MiB scoped), and at 512 lanes which is already in
    # the ~85%-of-HBM-roofline regime.
    budget = 4 * 1024 * 1024
    tc = (budget // (2 * F * itemsize)) // 128 * 128
    tc = max(128, min(512, tc))
    tc = min(tc, C)
    while C % tc:          # keep the grid exact (no partial edge blocks)
        tc -= 128
    return tc


def mapping_to_scale_shift(mapping, weight, bias, channels):
    """mapping: (B, F); weight: (2C, F) PyTorch layout; bias: (2C,).

    Returns (scale, shift), each (B, C, 1), matching the PyTorch module.
    """
    B, F = mapping.shape
    two_c = weight.shape[0]
    assert two_c == 2 * channels
    C = channels

    # Contiguous, metadata-only reshapes (no transpose, no extra HBM pass).
    w3 = weight.reshape(2, C, F)     # [0]=scale rows, [1]=shift rows
    b2 = bias.reshape(2, C)

    itemsize = jnp.dtype(weight.dtype).itemsize
    tc = _choose_col_tile(C, F, itemsize)
    grid = (C // tc,)

    # Advisory cost hint: memory-bound on the weight stream.
    cost = pl.CostEstimate(
        flops=2 * B * two_c * F + 4 * B * F,
        transcendentals=B * F,
        bytes_accessed=(two_c * F * itemsize
                        + B * F * mapping.dtype.itemsize
                        + two_c * itemsize
                        + 2 * B * C * mapping.dtype.itemsize),
    )

    scale, shift = pl.pallas_call(
        _silu_linear_split_kernel,
        out_shape=(
            jax.ShapeDtypeStruct((B, C), mapping.dtype),
            jax.ShapeDtypeStruct((B, C), mapping.dtype),
        ),
        grid_spec=pl.GridSpec(
            grid=grid,
            in_specs=[
                pl.BlockSpec((B, F), lambda j: (0, 0)),          # mapping (resident)
                pl.BlockSpec((2, tc, F), lambda j: (0, j, 0)),   # weight column tile
                pl.BlockSpec((2, tc), lambda j: (0, j)),         # bias tile
            ],
            out_specs=(
                pl.BlockSpec((B, tc), lambda j: (0, j)),         # scale (lane-dense)
                pl.BlockSpec((B, tc), lambda j: (0, j)),         # shift (lane-dense)
            ),
        ),
        compiler_params=pltpu.CompilerParams(
            dimension_semantics=("parallel",)),                  # v7x: 2 TCs split cols
        cost_estimate=cost,
    )(mapping, w3, b2)

    # Module contract: (B, C, 1).  Free reshape; downstream users should
    # broadcast from the lane-dense (B, C) form when possible.
    return scale[:, :, None], shift[:, :, None]


if __name__ == "__main__":
    def reference(mapping, weight, bias, channels):
        silu = mapping * jax.nn.sigmoid(mapping)
        out = silu @ weight.T + bias
        return out[:, :channels, None], out[:, channels:, None]

    key = jax.random.PRNGKey(0)

    # --- Toy shape implied by the module: batch=2, features=32, channels=4 ---
    B, FEATURES, CHANNELS = 2, 32, 4
    k1, k2, k3, key = jax.random.split(key, 4)
    mapping = jax.random.normal(k1, (B, FEATURES), dtype=jnp.float32)
    weight = jax.random.normal(k2, (2 * CHANNELS, FEATURES), dtype=jnp.float32) * 0.1
    bias = jax.random.normal(k3, (2 * CHANNELS,), dtype=jnp.float32) * 0.1

    scale, shift = mapping_to_scale_shift(mapping, weight, bias, CHANNELS)
    jax.block_until_ready((scale, shift))

    ref_scale, ref_shift = reference(mapping, weight, bias, CHANNELS)
    assert scale.shape == (B, CHANNELS, 1) and shift.shape == (B, CHANNELS, 1)
    assert jnp.allclose(scale, ref_scale, atol=1e-5, rtol=1e-5)
    assert jnp.allclose(shift, ref_shift, atol=1e-5, rtol=1e-5)

    # --- Aligned shape exercising the tiled path (tc=512 -> grid=(2,)) ---
    B2, F2, C2 = 4, 64, 1024
    k1, k2, k3, key = jax.random.split(key, 4)
    mapping2 = jax.random.normal(k1, (B2, F2), dtype=jnp.float32)
    weight2 = jax.random.normal(k2, (2 * C2, F2), dtype=jnp.float32) * 0.05
    bias2 = jax.random.normal(k3, (2 * C2,), dtype=jnp.float32) * 0.05

    scale2, shift2 = mapping_to_scale_shift(mapping2, weight2, bias2, C2)
    jax.block_until_ready((scale2, shift2))

    ref_scale2, ref_shift2 = reference(mapping2, weight2, bias2, C2)
    assert scale2.shape == (B2, C2, 1) and shift2.shape == (B2, C2, 1)
    assert jnp.allclose(scale2, ref_scale2, atol=1e-3, rtol=1e-3)
    assert jnp.allclose(shift2, ref_shift2, atol=1e-3, rtol=1e-3)

    print("KERNEL_OK")
</pallas_src>

<mosaic_0001>
module attributes {stable_mosaic.version = 11 : i64} {
  func.func @_silu_linear_split_kernel(%arg0: i32, %arg1: memref<2x32xf32, #tpu.memory_space<vmem>>, %arg2: memref<2x4x32xf32, #tpu.memory_space<vmem>>, %arg3: memref<2x4xf32, #tpu.memory_space<vmem>>, %arg4: memref<2x4xf32, #tpu.memory_space<vmem>>, %arg5: memref<2x4xf32, #tpu.memory_space<vmem>>) attributes {dimension_semantics = [#tpu.dimension_semantics<parallel>], iteration_bounds = array<i64: 1>, scalar_prefetch = 0 : i64, scratch_operands = 0 : i64, tpu.core_type = #tpu.core_type<tc>, window_params = [{pipeline_mode = #tpu.pipeline_mode<synchronous>, transform_indices = @transform_0, window_bounds = array<i64: 2, 32>}, {transform_indices = @transform_1, window_bounds = array<i64: 2, 4, 32>}, {transform_indices = @transform_2, window_bounds = array<i64: 2, 4>}, {transform_indices = @transform_3, window_bounds = array<i64: 2, 4>}, {transform_indices = @transform_4, window_bounds = array<i64: 2, 4>}]} {
    %c0 = arith.constant 0 : index
    %c0_0 = arith.constant 0 : index
    %0 = vector.load %arg1[%c0, %c0_0] : memref<2x32xf32, #tpu.memory_space<vmem>>, vector<2x32xf32>
    %1 = arith.negf %0 : vector<2x32xf32>
    %2 = math.exp %1 : vector<2x32xf32>
    %cst = arith.constant 1.000000e+00 : f32
    %3 = vector.broadcast %cst : f32 to vector<2x32xf32>
    %4 = arith.addf %3, %2 : vector<2x32xf32>
    %5 = arith.divf %3, %4 : vector<2x32xf32>
    %6 = arith.mulf %0, %5 : vector<2x32xf32>
    %c0_1 = arith.constant 0 : index
    %c0_2 = arith.constant 0 : index
    %c0_3 = arith.constant 0 : index
    %7 = vector.load %arg2[%c0_1, %c0_2, %c0_3] : memref<2x4x32xf32, #tpu.memory_space<vmem>>, vector<1x4x32xf32>
    %8 = vector.shape_cast %7 : vector<1x4x32xf32> to vector<4x32xf32>
    %cst_4 = arith.constant dense<0.000000e+00> : vector<2x4xf32>
    %9 = tpu.matmul %6, %8, %cst_4 {dimension_numbers = #tpu.dot_dimension_numbers<[1], [1], [0], [0], [0, 0, 1, 0], [], []>} : vector<2x32xf32>, vector<4x32xf32>, vector<2x4xf32> -> vector<2x4xf32>
    %c1 = arith.constant 1 : index
    %c0_5 = arith.constant 0 : index
    %c0_6 = arith.constant 0 : index
    %10 = vector.load %arg2[%c1, %c0_5, %c0_6] : memref<2x4x32xf32, #tpu.memory_space<vmem>>, vector<1x4x32xf32>
    %11 = vector.shape_cast %10 : vector<1x4x32xf32> to vector<4x32xf32>
    %cst_7 = arith.constant dense<0.000000e+00> : vector<2x4xf32>
    %12 = tpu.matmul %6, %11, %cst_7 {dimension_numbers = #tpu.dot_dimension_numbers<[1], [1], [0], [0], [0, 0, 1, 0], [], []>} : vector<2x32xf32>, vector<4x32xf32>, vector<2x4xf32> -> vector<2x4xf32>
    %c0_8 = arith.constant 0 : index
    %c0_9 = arith.constant 0 : index
    %13 = vector.load %arg3[%c0_8, %c0_9] : memref<2x4xf32, #tpu.memory_space<vmem>>, vector<1x4xf32>
    %c1_10 = arith.constant 1 : index
    %c0_11 = arith.constant 0 : index
    %14 = vector.load %arg3[%c1_10, %c0_11] : memref<2x4xf32, #tpu.memory_space<vmem>>, vector<1x4xf32>
    %15 = vector.broadcast %13 : vector<1x4xf32> to vector<2x4xf32>
    %16 = arith.addf %9, %15 : vector<2x4xf32>
    %c0_12 = arith.constant 0 : index
    %c0_13 = arith.constant 0 : index
    %17 = vector.load %arg4[%c0_12, %c0_13] : memref<2x4xf32, #tpu.memory_space<vmem>>, vector<2x4xf32>
    tpu.vector_store %arg4[%c0_12, %c0_13], %16 {strides = array<i32>} : memref<2x4xf32, #tpu.memory_space<vmem>>, vector<2x4xf32>,
    %18 = vector.broadcast %14 : vector<1x4xf32> to vector<2x4xf32>
    %19 = arith.addf %12, %18 : vector<2x4xf32>
    %c0_14 = arith.constant 0 : index
    %c0_15 = arith.constant 0 : index
    %20 = vector.load %arg5[%c0_14, %c0_15] : memref<2x4xf32, #tpu.memory_space<vmem>>, vector<2x4xf32>
    tpu.vector_store %arg5[%c0_14, %c0_15], %19 {strides = array<i32>} : memref<2x4xf32, #tpu.memory_space<vmem>>, vector<2x4xf32>,
    return
  }
  func.func @transform_0(%arg0: i32) -> (i32, i32) {
    %c0_i32 = arith.constant 0 : i32
    %c0_i32_0 = arith.constant 0 : i32
    %c0_i32_1 = arith.constant 0 : i32
    return %c0_i32, %c0_i32_0 : i32, i32
  }
  func.func @transform_1(%arg0: i32) -> (i32, i32, i32) {
    %c0_i32 = arith.constant 0 : i32
    %c0_i32_0 = arith.constant 0 : i32
    %c0_i32_1 = arith.constant 0 : i32
    return %c0_i32, %arg0, %c0_i32_0 : i32, i32, i32
  }
  func.func @transform_2(%arg0: i32) -> (i32, i32) {
    %c0_i32 = arith.constant 0 : i32
    %c0_i32_0 = arith.constant 0 : i32
    return %c0_i32, %arg0 : i32, i32
  }
  func.func @transform_3(%arg0: i32) -> (i32, i32) {
    %c0_i32 = arith.constant 0 : i32
    %c0_i32_0 = arith.constant 0 : i32
    return %c0_i32, %arg0 : i32, i32
  }
  func.func @transform_4(%arg0: i32) -> (i32, i32) {
    %c0_i32 = arith.constant 0 : i32
    %c0_i32_0 = arith.constant 0 : i32
    return %c0_i32, %arg0 : i32, i32
  }
}

</mosaic_0001>

<llo_original>
// kernel: tpu_custom_call.1
$region0: #{tpu_custom_call.1}
  #allocation0 [shape = 'u32[]', space=smem, size = 0x4, offset = 0x4, fixed_abs, tag = 'smem constant byte address 0x4 - core index']
  #allocation1 [shape = 'u32[72,128]{1,0:T(1,128)}', space=vmem, size = 0x9000, scoped, tag = 'internal scratch']
  %s0 = inlined_call_operand.hbm [shape: f32[2,32], index: 0, kind: input, shape index: {}]
  %s1 = inlined_call_operand.hbm [shape: f32[2,4,32], index: 1, kind: input, shape index: {}]
  %s2 = inlined_call_operand.hbm [shape: f32[2,4], index: 2, kind: input, shape index: {}]
  %s3 = inlined_call_operand.hbm [shape: f32[2,4], index: 3, kind: output, shape index: {0}]
  %s4 = inlined_call_operand.hbm [shape: f32[2,4], index: 4, kind: output, shape index: {1}]
  %5 = xla_tuple %s3, %s4
  %s6 = sld [smem:[#allocation0]]
  $region42: #{tpu_custom_call.1} parent=0
    _
  %s8 = ssub.s32 1, %s6
  %s9 = scalar_select 0, %s8, %s6
  $region1: #{tpu_custom_call.1} parent=0
    #allocation2 [shape = 'u8[1024]{0}', space=vmem, size = 0x400, scoped, tag = 'input window, operand 0, single buffered']
    #allocation3 [shape = 's32[1]{0}', space=sflag, size = 0x4, scoped, tag = 'scoped memory for tpu_custom_call.1']
    #allocation4 [shape = 's32[1]{0}', space=sflag, size = 0x4, scoped, tag = 'scoped memory for tpu_custom_call.1']
    #allocation5 [shape = 'u8[4096]{0}', space=vmem, size = 0x1000, scoped, tag = 'input window, operand 1, single buffered']
    #allocation6 [shape = 's32[1]{0}', space=sflag, size = 0x4, scoped, tag = 'scoped memory for tpu_custom_call.1']
    #allocation7 [shape = 'u8[1024]{0}', space=vmem, size = 0x400, scoped, tag = 'input window, operand 2, single buffered']
    #allocation8 [shape = 'u8[1024]{0}', space=vmem, size = 0x400, scoped, tag = 'output window, operand 0, single buffered']
    #allocation9 [shape = 'u8[1024]{0}', space=vmem, size = 0x400, scoped, tag = 'output window, operand 1, single buffered']
    #allocation10 [shape = 's32[1]{0}', space=sflag, size = 0x4, scoped, tag = 'scoped memory for tpu_custom_call.1']
    %10 = vsyncpa [#allocation3], 0
    %11 = vsyncpa [#allocation6], 0
    %12 = vsyncpa [#allocation4], 0
    %13 = vsyncpa [#allocation10], 0
    // Predicated region
    $region2: #{tpu_custom_call.1} parent=1 // pred_check
      _
    $region3: #{tpu_custom_call.1} parent=1 // pred_check_branch
      %15 = sbr.rel (0) target = $region5
    $region4: #{tpu_custom_call.1} parent=1 // pred_region
      %17 = vsyncadd [#allocation3], 0
      %s19 = sshll.u32 %s0, 4
      %s20 = int_to_ptr.hbm [resolvable:$true] %s19
      %s21 = sshll.u32 [#allocation2], 4
      %s22 = int_to_ptr.vmem [resolvable:$true] %s21
      %24 = dma.hbm_to_vmem [thread:$0]  %s20, 32, %s22, [#allocation3]
    $region5: #{tpu_custom_call.1} parent=1 // pred_fallthru
      _
    // Predicated region
    $region6: #{tpu_custom_call.1} parent=1 // pred_check
      _
    $region7: #{tpu_custom_call.1} parent=1 // pred_check_branch
      %26 = sbr.rel (0) target = $region9
    $region8: #{tpu_custom_call.1} parent=1 // pred_region
      %28 = vsyncadd [#allocation6], 0
      %s29 = sshll.u32 %s1, 4
      %s30 = int_to_ptr.hbm [resolvable:$true] %s29
      %s31 = sshll.u32 [#allocation5], 4
      %s32 = int_to_ptr.vmem [resolvable:$true] %s31
      %37 = dma.hbm_to_vmem [thread:$0]  %s30, 128, %s32, [#allocation6], 64, 64, 4
    $region9: #{tpu_custom_call.1} parent=1 // pred_fallthru
      _
    // Predicated region
    $region10: #{tpu_custom_call.1} parent=1 // pred_check
      _
    $region11: #{tpu_custom_call.1} parent=1 // pred_check_branch
      %39 = sbr.rel (0) target = $region13
    $region12: #{tpu_custom_call.1} parent=1 // pred_region
      %41 = vsyncadd [#allocation6], 0
      %s43 = sshll.u32 %s2, 4
      %s44 = int_to_ptr.hbm [resolvable:$true] %s43
      %s45 = sshll.u32 [#allocation7], 4
      %s46 = int_to_ptr.vmem [resolvable:$true] %s45
      %48 = dma.hbm_to_vmem [thread:$0]  %s44, 32, %s46, [#allocation6]
    $region13: #{tpu_custom_call.1} parent=1 // pred_fallthru
      _
    // Predicated region
    $region14: #{tpu_custom_call.1} parent=1 // pred_check
      _
    $region15: #{tpu_custom_call.1} parent=1 // pred_check_branch
      %50 = sbr.rel (0) target = $region17
    $region16: #{tpu_custom_call.1} parent=1 // pred_region
      %52 = dma.done [#allocation3], 32
    $region17: #{tpu_custom_call.1} parent=1 // pred_fallthru
      _
    // Predicated region
    $region18: #{tpu_custom_call.1} parent=1 // pred_check
      _
    $region19: #{tpu_custom_call.1} parent=1 // pred_check_branch
      %54 = sbr.rel (0) target = $region21
    $region20: #{tpu_custom_call.1} parent=1 // pred_region
      %56 = dma.done [#allocation6], 128
    $region21: #{tpu_custom_call.1} parent=1 // pred_fallthru
      _
    // Predicated region
    $region22: #{tpu_custom_call.1} parent=1 // pred_check
      _
    $region23: #{tpu_custom_call.1} parent=1 // pred_check_branch
      %58 = sbr.rel (0) target = $region25
    $region24: #{tpu_custom_call.1} parent=1 // pred_region
      %60 = dma.done [#allocation6], 32
    $region25: #{tpu_custom_call.1} parent=1 // pred_fallthru
      _
    %v61 = vld [vmem:[#allocation2] sm:$0x3]
    %v62 = vxor.u32 %v61, 2147483648
    %v63 = vmul.f32 %v62, 1.442695
    %v64 = vpow.pop %v63
    %v65 = vadd.f32 %v64, 1.0
    %v66 = vrcp.pop %v65
    %v67 = vmul.f32 %v65, %v66
    %v68 = vsub.f32 1.0, %v67
    %v69 = vmul.f32 %v66, %v68
    %v70 = vadd.f32 %v66, %v69
    %vm71 = vweird.f32 %v65
    %vm72 = vweird.f32 %v66
    %vm73 = vmor %vm71, %vm72
    %v74 = vsel %vm73, %v66, %v70
    %v75 = vand.u32 2147483647, %v65
    %vm76 = vcmp.eq.f32.partialorder %v75, 8.507059e+37
    %v77 = vand.u32 %v65, 2147483648
    %v78 = vor.u32 1.1754944e-38, %v77
    %v79 = vsel %vm76, %v78, %v74
    %v80 = vmul.f32 1.0, %v79
    %v81 = vmul.f32 %v61, %v80
    %v82 = vld [vmem:[#allocation5] sm:$0xf]
    %s83 = scalar_lea.vmem [#allocation5], 4
    %v84 = vld [vmem:[%s83] sm:$0xf]
    %v85 = vld [vmem:[#allocation7] sm:$0x1]
    %v86 = vld [vmem:[#allocation7 + $0x1] sm:$0x1]
    %v87 = vperm.slane %v85, 0
    %vm88 = vcmask 261120
    %v90 = vsel %vm88, %v81, 0
    %v93 = vsel %vm88, %v82, 0
    %95 = vmatpush.xpose.msra.mxu0 0.0
    %96 = vmatpush.xpose.msra.mxu0 0.0
    %97 = vmatpush.xpose.msra.mxu0 0.0
    %98 = vmatpush.xpose.msra.mxu0 0.0
    %99 = vmatpush.xpose.msra.mxu0 0.0
    %100 = vmatpush.xpose.msra.mxu0 0.0
    %101 = vmatpush.xpose.msra.mxu0 0.0
    %102 = vmatpush.xpose.msra.mxu0 0.0
    %103 = vmatpush.xpose.msra.mxu0 0.0
    %104 = vmatpush.xpose.msra.mxu0 0.0
    %105 = vmatpush.xpose.msra.mxu0 0.0
    %106 = vmatpush.xpose.msra.mxu0 0.0
    %107 = vmatpush.xpose.msra.mxu0 0.0
    %108 = vmatpush.xpose.msra.mxu0 0.0
    %109 = vmatpush.xpose.msra.mxu0 0.0
    %110 = vmatpush.xpose.msra.mxu0 %v93
    %111 = vmatmul.f32.gmra.mxu0 %v90
    %v112 = vpop.f32.mrf.mxu0
    %v113 = vadd.f32 %v87, %v112
    %114 = vdwg.mxu0
    %vm115 = vcmask 25600
    %116 = vst.msk [vmem:[#allocation8] sm:$0x3] %vm115, %v113
    %v117 = vperm.slane %v86, 0
    %v119 = vsel %vm88, %v84, 0
    %121 = vmatpush.xpose.msra.mxu0 0.0
    %122 = vmatpush.xpose.msra.mxu0 0.0
    %123 = vmatpush.xpose.msra.mxu0 0.0
    %124 = vmatpush.xpose.msra.mxu0 0.0
    %125 = vmatpush.xpose.msra.mxu0 0.0
    %126 = vmatpush.xpose.msra.mxu0 0.0
    %127 = vmatpush.xpose.msra.mxu0 0.0
    %128 = vmatpush.xpose.msra.mxu0 0.0
    %129 = vmatpush.xpose.msra.mxu0 0.0
    %130 = vmatpush.xpose.msra.mxu0 0.0
    %131 = vmatpush.xpose.msra.mxu0 0.0
    %132 = vmatpush.xpose.msra.mxu0 0.0
    %133 = vmatpush.xpose.msra.mxu0 0.0
    %134 = vmatpush.xpose.msra.mxu0 0.0
    %135 = vmatpush.xpose.msra.mxu0 0.0
    %136 = vmatpush.xpose.msra.mxu0 %v119
    %137 = vmatmul.f32.gmra.mxu0 %v90
    %v138 = vpop.f32.mrf.mxu0
    %v139 = vadd.f32 %v117, %v138
    %140 = vdwg.mxu0
    %141 = vst.msk [vmem:[#allocation9] sm:$0x3] %vm115, %v139
    // Predicated region
    $region26: #{tpu_custom_call.1} parent=1 // pred_check
      _
    $region27: #{tpu_custom_call.1} parent=1 // pred_check_branch
      %143 = sbr.rel (0) target = $region29
    $region28: #{tpu_custom_call.1} parent=1 // pred_region
      %145 = vsyncadd [#allocation4], 0
      %s147 = sshll.u32 [#allocation8], 4
      %s148 = int_to_ptr.vmem [resolvable:$true] %s147
      %s149 = sshll.u32 %s3, 4
      %s150 = int_to_ptr.hbm [resolvable:$true] %s149
      %152 = dma.vmem_to_hbm [thread:$0]  %s148, 32, %s150, [#allocation4]
    $region29: #{tpu_custom_call.1} parent=1 // pred_fallthru
      _
    // Predicated region
    $region30: #{tpu_custom_call.1} parent=1 // pred_check
      _
    $region31: #{tpu_custom_call.1} parent=1 // pred_check_branch
      %154 = sbr.rel (0) target = $region33
    $region32: #{tpu_custom_call.1} parent=1 // pred_region
      %156 = vsyncadd [#allocation10], 0
      %s158 = sshll.u32 [#allocation9], 4
      %s159 = int_to_ptr.vmem [resolvable:$true] %s158
      %s160 = sshll.u32 %s4, 4
      %s161 = int_to_ptr.hbm [resolvable:$true] %s160
      %163 = dma.vmem_to_hbm [thread:$0]  %s159, 32, %s161, [#allocation10]
    $region33: #{tpu_custom_call.1} parent=1 // pred_fallthru
      _
    // Predicated region
    $region34: #{tpu_custom_call.1} parent=1 // pred_check
      _
    $region35: #{tpu_custom_call.1} parent=1 // pred_check_branch
      %165 = sbr.rel (0) target = $region37
    $region36: #{tpu_custom_call.1} parent=1 // pred_region
      %167 = dma.done [#allocation4], 32
    $region37: #{tpu_custom_call.1} parent=1 // pred_fallthru
      _
    // Predicated region
    $region38: #{tpu_custom_call.1} parent=1 // pred_check
      _
    $region39: #{tpu_custom_call.1} parent=1 // pred_check_branch
      %169 = sbr.rel (0) target = $region41
    $region40: #{tpu_custom_call.1} parent=1 // pred_region
      %171 = dma.done [#allocation10], 32
    $region41: #{tpu_custom_call.1} parent=1 // pred_fallthru
      _
    %172 = vsyncpa [#allocation3], 1
    %173 = vsyncpa [#allocation6], 1
    %174 = vsyncpa [#allocation4], 1
    %175 = vsyncpa [#allocation10], 1

</llo_original>
